<compile_context>
chip_gen: v6e
topology: v6e:2x2x1
jax: 0.10.0
libtpu: 0.0.40
codegen_flags: <defaults>
</compile_context>

<pallas_src>
import jax
import jax.numpy as jnp
from jax.experimental import pallas as pl
from jax.experimental.pallas import tpu as pltpu

NUM_CLASSES = 8
_C_IN = 10
_C_IN_PAD = 16   # 10 real input channels padded to 16 (extra K is free on the MXU)


def _round_up(x, m):
    return (x + m - 1) // m * m


# --------------------------------------------------------------------------
# Kernel: all 5 matmuls + biases + ReLUs for one batch tile, real widths.
# --------------------------------------------------------------------------
def _fused_forward_kernel(x_ref, w1_ref, w2_ref, w3_ref, w4_ref, w5_ref,
                          b128_ref, b256_ref, o_ref):
    """
    x_ref  : (TILE_B, 16)  bf16, real features in cols [0, 10)
    w1_ref : (16, 128)     conv1 center tap, real block [0:10, 0:64]
    w2_ref : (128, 128)    conv2 center tap, real block [0:64, 0:128]
    w3_ref : (128, 256)    conv3 center tap (full)
    w4_ref : (256, 128)    fc1, real block [0:256, 0:64]
    w5_ref : (128, 128)    fc2, real block [0:64, 0:8]
    b128_ref: (4, 128) f32 biases (conv1, conv2, fc1, fc2), zero-padded
    b256_ref: (1, 256) f32 conv3 bias
    o_ref  : (TILE_B, 8)   f32 logits
    """
    f32 = jnp.float32
    dt = x_ref.dtype
    b128 = b128_ref[...]
    b256 = b256_ref[...]

    # conv1 (center tap only; with L==1 and pad=1 taps 0/2 see zero padding)
    h = jnp.dot(x_ref[...], w1_ref[...], preferred_element_type=f32)
    h = jnp.maximum(h + b128[0:1, :], 0.0)                       # (tb, 128)

    # conv2 + ReLU
    h = jnp.dot(h.astype(dt), w2_ref[...], preferred_element_type=f32)
    h = jnp.maximum(h + b128[1:2, :], 0.0)                       # (tb, 128)

    # Dropout(p=0.2) is identity at inference.
    # TODO(synk): training-mode dropout (RNG mask) not implemented.

    # conv3 + ReLU
    h = jnp.dot(h.astype(dt), w3_ref[...], preferred_element_type=f32)
    h = jnp.maximum(h + b256, 0.0)                               # (tb, 256)

    # fc1 + ReLU
    h = jnp.dot(h.astype(dt), w4_ref[...], preferred_element_type=f32)
    h = jnp.maximum(h + b128[2:3, :], 0.0)                       # (tb, 128)

    # fc2 (logits, no activation); narrow writeback of the real classes only.
    h = jnp.dot(h.astype(dt), w5_ref[...], preferred_element_type=f32) + b128[3:4, :]
    o_ref[...] = h[:, :NUM_CLASSES].astype(o_ref.dtype)


# --------------------------------------------------------------------------
# One-time parameter preparation (NOT in the per-call hot path).
# --------------------------------------------------------------------------
def prepare_params(params, mxu_dtype=jnp.bfloat16):
    """Slice center taps, transpose, pad to lane-tile widths, cast to bf16."""
    f32 = jnp.float32

    def pad2(w, rows, cols):
        return jnp.pad(w, ((0, rows - w.shape[0]), (0, cols - w.shape[1])))

    w1 = pad2(jnp.transpose(params["conv1_w"][:, :, 1]).astype(f32), _C_IN_PAD, 128)
    w2 = pad2(jnp.transpose(params["conv2_w"][:, :, 1]).astype(f32), 128, 128)
    w3 = pad2(jnp.transpose(params["conv3_w"][:, :, 1]).astype(f32), 128, 256)
    w4 = pad2(jnp.transpose(params["fc1_w"]).astype(f32), 256, 128)
    w5 = pad2(jnp.transpose(params["fc2_w"]).astype(f32), 128, 128)

    def pad_b(b, n):
        return jnp.pad(b.astype(f32), (0, n - b.shape[0]))

    b128 = jnp.stack([
        pad_b(params["conv1_b"], 128),
        pad_b(params["conv2_b"], 128),
        pad_b(params["fc1_b"], 128),
        pad_b(params["fc2_b"], 128),
    ])                                                   # (4, 128) f32
    b256 = params["conv3_b"].astype(f32).reshape(1, 256)  # (1, 256) f32

    return {
        "w1": w1.astype(mxu_dtype), "w2": w2.astype(mxu_dtype),
        "w3": w3.astype(mxu_dtype), "w4": w4.astype(mxu_dtype),
        "w5": w5.astype(mxu_dtype),
        "b128": b128, "b256": b256,
    }


# --------------------------------------------------------------------------
# Batch-tile selection: big tiles (low step overhead), minimal ragged padding,
# and >= 2 tiles for large batches so v7x megacore gets both TensorCores busy.
# --------------------------------------------------------------------------
def _choose_tiling(B, *, max_tile=4096):
    if B <= 512:
        return _round_up(B, 8), 1
    nb = max(2, pl.cdiv(B, max_tile))
    tile_b = _round_up(pl.cdiv(B, nb), 256)
    nb = pl.cdiv(B, tile_b)
    return tile_b, nb


# --------------------------------------------------------------------------
# Hot-path forward: pad input, single pallas_call over a batch grid, slice out.
# --------------------------------------------------------------------------
def conv1dnet_forward(x_ncl, prepared):
    """x_ncl: (B, 10, 1) float32 (PyTorch NCL). Returns (B, NUM_CLASSES) f32."""
    B, c_in, L = x_ncl.shape
    assert c_in == _C_IN and L == 1, "fc1=Linear(256,64) forces spatial length L==1"

    w1, w2, w3, w4, w5 = (prepared[k] for k in ("w1", "w2", "w3", "w4", "w5"))
    b128, b256 = prepared["b128"], prepared["b256"]
    mxu_dt = w1.dtype

    tile_b, nb = _choose_tiling(B)
    Bp = tile_b * nb

    # Narrow bf16 input slab (Bp, 16); cast BEFORE pad so no f32 intermediate.
    x = x_ncl[:, :, 0].astype(mxu_dt)
    x = jnp.pad(x, ((0, Bp - B), (0, _C_IN_PAD - c_in)))

    flops = 2 * Bp * (_C_IN_PAD * 128 + 128 * 128 + 128 * 256 + 256 * 128 + 128 * 128)
    bytes_accessed = (
        x.size * x.dtype.itemsize
        + sum(w.size * w.dtype.itemsize for w in (w1, w2, w3, w4, w5))
        + b128.size * b128.dtype.itemsize
        + b256.size * b256.dtype.itemsize
        + Bp * NUM_CLASSES * 4
    )

    const2 = lambda i: (0, 0)

    out = pl.pallas_call(
        _fused_forward_kernel,
        out_shape=jax.ShapeDtypeStruct((Bp, NUM_CLASSES), jnp.float32),
        grid=(nb,),
        in_specs=[
            pl.BlockSpec((tile_b, _C_IN_PAD), lambda i: (i, 0)),  # x tile
            pl.BlockSpec((_C_IN_PAD, 128), const2),               # conv1 W (resident)
            pl.BlockSpec((128, 128), const2),                     # conv2 W (resident)
            pl.BlockSpec((128, 256), const2),                     # conv3 W (resident)
            pl.BlockSpec((256, 128), const2),                     # fc1 W (resident)
            pl.BlockSpec((128, 128), const2),                     # fc2 W (resident)
            pl.BlockSpec((4, 128), const2),                       # biases (128-wide)
            pl.BlockSpec((1, 256), const2),                       # conv3 bias
        ],
        out_specs=pl.BlockSpec((tile_b, NUM_CLASSES), lambda i: (i, 0)),
        compiler_params=pltpu.CompilerParams(
            dimension_semantics=("parallel",)),
        cost_estimate=pl.CostEstimate(
            flops=flops, transcendentals=0, bytes_accessed=bytes_accessed),
    )(x, w1, w2, w3, w4, w5, b128, b256)

    return out[:B]


# --------------------------------------------------------------------------
# Deterministic parameters with the exact PyTorch module shapes.
# --------------------------------------------------------------------------
def init_params(key):
    ks = jax.random.split(key, 10)

    def w(k, shape, fan_in):
        return (jax.random.normal(k, shape, jnp.float32) / jnp.sqrt(fan_in)).astype(jnp.float32)

    return {
        "conv1_w": w(ks[0], (64, 10, 3), 10 * 3),     # Conv1d(10, 64, 3, pad=1)
        "conv1_b": w(ks[1], (64,), 10 * 3),
        "conv2_w": w(ks[2], (128, 64, 3), 64 * 3),    # Conv1d(64, 128, 3, pad=1)
        "conv2_b": w(ks[3], (128,), 64 * 3),
        "conv3_w": w(ks[4], (256, 128, 3), 128 * 3),  # Conv1d(128, 256, 3, pad=1)
        "conv3_b": w(ks[5], (256,), 128 * 3),
        "fc1_w":   w(ks[6], (64, 256), 256),          # Linear(256, 64)
        "fc1_b":   w(ks[7], (64,), 256),
        "fc2_w":   w(ks[8], (NUM_CLASSES, 64), 64),   # Linear(64, num_classes)
        "fc2_b":   w(ks[9], (NUM_CLASSES,), 64),
    }


if __name__ == "__main__":
    key = jax.random.PRNGKey(0)
    k_params, k_x = jax.random.split(key)

    params = init_params(k_params)
    prepared = prepare_params(params)            # one-time setup, off hot path
    jax.block_until_ready(prepared)

    # batch=8, 10 input channels, spatial length 1 (required by the module)
    x = jax.random.normal(k_x, (8, _C_IN, 1), jnp.float32)

    fwd = jax.jit(conv1dnet_forward)
    logits = fwd(x, prepared)
    jax.block_until_ready(logits)

    assert logits.shape == (8, NUM_CLASSES)
    assert jnp.all(jnp.isfinite(logits))
    print("KERNEL_OK")
</pallas_src>

<mosaic_0001>
module attributes {stable_mosaic.version = 11 : i64} {
  func.func @_fused_forward_kernel(%arg0: i32, %arg1: memref<8x16xbf16, #tpu.memory_space<vmem>>, %arg2: memref<16x128xbf16, #tpu.memory_space<vmem>>, %arg3: memref<128x128xbf16, #tpu.memory_space<vmem>>, %arg4: memref<128x256xbf16, #tpu.memory_space<vmem>>, %arg5: memref<256x128xbf16, #tpu.memory_space<vmem>>, %arg6: memref<128x128xbf16, #tpu.memory_space<vmem>>, %arg7: memref<4x128xf32, #tpu.memory_space<vmem>>, %arg8: memref<1x256xf32, #tpu.memory_space<vmem>>, %arg9: memref<8x8xf32, #tpu.memory_space<vmem>>) attributes {dimension_semantics = [#tpu.dimension_semantics<parallel>], iteration_bounds = array<i64: 1>, scalar_prefetch = 0 : i64, scratch_operands = 0 : i64, tpu.core_type = #tpu.core_type<tc>, window_params = [{transform_indices = @transform_0, window_bounds = array<i64: 8, 16>}, {pipeline_mode = #tpu.pipeline_mode<synchronous>, transform_indices = @transform_1, window_bounds = array<i64: 16, 128>}, {pipeline_mode = #tpu.pipeline_mode<synchronous>, transform_indices = @transform_2, window_bounds = array<i64: 128, 128>}, {pipeline_mode = #tpu.pipeline_mode<synchronous>, transform_indices = @transform_3, window_bounds = array<i64: 128, 256>}, {pipeline_mode = #tpu.pipeline_mode<synchronous>, transform_indices = @transform_4, window_bounds = array<i64: 256, 128>}, {pipeline_mode = #tpu.pipeline_mode<synchronous>, transform_indices = @transform_5, window_bounds = array<i64: 128, 128>}, {pipeline_mode = #tpu.pipeline_mode<synchronous>, transform_indices = @transform_6, window_bounds = array<i64: 4, 128>}, {pipeline_mode = #tpu.pipeline_mode<synchronous>, transform_indices = @transform_7, window_bounds = array<i64: 1, 256>}, {transform_indices = @transform_8, window_bounds = array<i64: 8, 8>}]} {
    %c0 = arith.constant 0 : index
    %c0_0 = arith.constant 0 : index
    %0 = vector.load %arg7[%c0, %c0_0] : memref<4x128xf32, #tpu.memory_space<vmem>>, vector<4x128xf32>
    %c0_1 = arith.constant 0 : index
    %c0_2 = arith.constant 0 : index
    %1 = vector.load %arg8[%c0_1, %c0_2] : memref<1x256xf32, #tpu.memory_space<vmem>>, vector<1x256xf32>
    %c0_3 = arith.constant 0 : index
    %c0_4 = arith.constant 0 : index
    %2 = vector.load %arg1[%c0_3, %c0_4] : memref<8x16xbf16, #tpu.memory_space<vmem>>, vector<8x16xbf16>
    %c0_5 = arith.constant 0 : index
    %c0_6 = arith.constant 0 : index
    %3 = vector.load %arg2[%c0_5, %c0_6] : memref<16x128xbf16, #tpu.memory_space<vmem>>, vector<16x128xbf16>
    %cst = arith.constant dense<0.000000e+00> : vector<8x128xf32>
    %4 = tpu.matmul %2, %3, %cst {dimension_numbers = #tpu.dot_dimension_numbers<[1], [0], [0], [1], [0, 0, 1, 1], [], []>} : vector<8x16xbf16>, vector<16x128xbf16>, vector<8x128xf32> -> vector<8x128xf32>
    %5 = vector.extract_strided_slice %0 {offsets = [0, 0], sizes = [1, 128], strides = [1, 1]} : vector<4x128xf32> to vector<1x128xf32>
    %6 = vector.broadcast %5 : vector<1x128xf32> to vector<8x128xf32>
    %7 = arith.addf %4, %6 : vector<8x128xf32>
    %cst_7 = arith.constant 0.000000e+00 : f32
    %8 = vector.broadcast %cst_7 : f32 to vector<8x128xf32>
    %9 = arith.maximumf %7, %8 : vector<8x128xf32>
    %10 = arith.truncf %9 : vector<8x128xf32> to vector<8x128xbf16>
    %c0_8 = arith.constant 0 : index
    %c0_9 = arith.constant 0 : index
    %11 = vector.load %arg3[%c0_8, %c0_9] : memref<128x128xbf16, #tpu.memory_space<vmem>>, vector<128x128xbf16>
    %cst_10 = arith.constant dense<0.000000e+00> : vector<8x128xf32>
    %12 = tpu.matmul %10, %11, %cst_10 {dimension_numbers = #tpu.dot_dimension_numbers<[1], [0], [0], [1], [0, 0, 1, 1], [], []>} : vector<8x128xbf16>, vector<128x128xbf16>, vector<8x128xf32> -> vector<8x128xf32>
    %13 = vector.extract_strided_slice %0 {offsets = [1, 0], sizes = [1, 128], strides = [1, 1]} : vector<4x128xf32> to vector<1x128xf32>
    %14 = vector.broadcast %13 : vector<1x128xf32> to vector<8x128xf32>
    %15 = arith.addf %12, %14 : vector<8x128xf32>
    %cst_11 = arith.constant 0.000000e+00 : f32
    %16 = vector.broadcast %cst_11 : f32 to vector<8x128xf32>
    %17 = arith.maximumf %15, %16 : vector<8x128xf32>
    %18 = arith.truncf %17 : vector<8x128xf32> to vector<8x128xbf16>
    %c0_12 = arith.constant 0 : index
    %c0_13 = arith.constant 0 : index
    %19 = vector.load %arg4[%c0_12, %c0_13] : memref<128x256xbf16, #tpu.memory_space<vmem>>, vector<128x256xbf16>
    %cst_14 = arith.constant dense<0.000000e+00> : vector<8x256xf32>
    %20 = tpu.matmul %18, %19, %cst_14 {dimension_numbers = #tpu.dot_dimension_numbers<[1], [0], [0], [1], [0, 0, 1, 1], [], []>} : vector<8x128xbf16>, vector<128x256xbf16>, vector<8x256xf32> -> vector<8x256xf32>
    %21 = vector.broadcast %1 : vector<1x256xf32> to vector<8x256xf32>
    %22 = arith.addf %20, %21 : vector<8x256xf32>
    %cst_15 = arith.constant 0.000000e+00 : f32
    %23 = vector.broadcast %cst_15 : f32 to vector<8x256xf32>
    %24 = arith.maximumf %22, %23 : vector<8x256xf32>
    %25 = arith.truncf %24 : vector<8x256xf32> to vector<8x256xbf16>
    %c0_16 = arith.constant 0 : index
    %c0_17 = arith.constant 0 : index
    %26 = vector.load %arg5[%c0_16, %c0_17] : memref<256x128xbf16, #tpu.memory_space<vmem>>, vector<256x128xbf16>
    %cst_18 = arith.constant dense<0.000000e+00> : vector<8x128xf32>
    %27 = tpu.matmul %25, %26, %cst_18 {dimension_numbers = #tpu.dot_dimension_numbers<[1], [0], [0], [1], [0, 0, 1, 1], [], []>} : vector<8x256xbf16>, vector<256x128xbf16>, vector<8x128xf32> -> vector<8x128xf32>
    %28 = vector.extract_strided_slice %0 {offsets = [2, 0], sizes = [1, 128], strides = [1, 1]} : vector<4x128xf32> to vector<1x128xf32>
    %29 = vector.broadcast %28 : vector<1x128xf32> to vector<8x128xf32>
    %30 = arith.addf %27, %29 : vector<8x128xf32>
    %cst_19 = arith.constant 0.000000e+00 : f32
    %31 = vector.broadcast %cst_19 : f32 to vector<8x128xf32>
    %32 = arith.maximumf %30, %31 : vector<8x128xf32>
    %33 = arith.truncf %32 : vector<8x128xf32> to vector<8x128xbf16>
    %c0_20 = arith.constant 0 : index
    %c0_21 = arith.constant 0 : index
    %34 = vector.load %arg6[%c0_20, %c0_21] : memref<128x128xbf16, #tpu.memory_space<vmem>>, vector<128x128xbf16>
    %cst_22 = arith.constant dense<0.000000e+00> : vector<8x128xf32>
    %35 = tpu.matmul %33, %34, %cst_22 {dimension_numbers = #tpu.dot_dimension_numbers<[1], [0], [0], [1], [0, 0, 1, 1], [], []>} : vector<8x128xbf16>, vector<128x128xbf16>, vector<8x128xf32> -> vector<8x128xf32>
    %36 = vector.extract_strided_slice %0 {offsets = [3, 0], sizes = [1, 128], strides = [1, 1]} : vector<4x128xf32> to vector<1x128xf32>
    %37 = vector.broadcast %36 : vector<1x128xf32> to vector<8x128xf32>
    %38 = arith.addf %35, %37 : vector<8x128xf32>
    %39 = vector.extract_strided_slice %38 {offsets = [0, 0], sizes = [8, 8], strides = [1, 1]} : vector<8x128xf32> to vector<8x8xf32>
    %c0_23 = arith.constant 0 : index
    %c0_24 = arith.constant 0 : index
    %40 = vector.load %arg9[%c0_23, %c0_24] : memref<8x8xf32, #tpu.memory_space<vmem>>, vector<8x8xf32>
    tpu.vector_store %arg9[%c0_23, %c0_24], %39 {strides = array<i32>} : memref<8x8xf32, #tpu.memory_space<vmem>>, vector<8x8xf32>,
    return
  }
  func.func @transform_0(%arg0: i32) -> (i32, i32) {
    %c0_i32 = arith.constant 0 : i32
    %c0_i32_0 = arith.constant 0 : i32
    return %arg0, %c0_i32 : i32, i32
  }
  func.func @transform_1(%arg0: i32) -> (i32, i32) {
    %c0_i32 = arith.constant 0 : i32
    %c0_i32_0 = arith.constant 0 : i32
    %c0_i32_1 = arith.constant 0 : i32
    return %c0_i32, %c0_i32_0 : i32, i32
  }
  func.func @transform_2(%arg0: i32) -> (i32, i32) {
    %c0_i32 = arith.constant 0 : i32
    %c0_i32_0 = arith.constant 0 : i32
    %c0_i32_1 = arith.constant 0 : i32
    return %c0_i32, %c0_i32_0 : i32, i32
  }
  func.func @transform_3(%arg0: i32) -> (i32, i32) {
    %c0_i32 = arith.constant 0 : i32
    %c0_i32_0 = arith.constant 0 : i32
    %c0_i32_1 = arith.constant 0 : i32
    return %c0_i32, %c0_i32_0 : i32, i32
  }
  func.func @transform_4(%arg0: i32) -> (i32, i32) {
    %c0_i32 = arith.constant 0 : i32
    %c0_i32_0 = arith.constant 0 : i32
    %c0_i32_1 = arith.constant 0 : i32
    return %c0_i32, %c0_i32_0 : i32, i32
  }
  func.func @transform_5(%arg0: i32) -> (i32, i32) {
    %c0_i32 = arith.constant 0 : i32
    %c0_i32_0 = arith.constant 0 : i32
    %c0_i32_1 = arith.constant 0 : i32
    return %c0_i32, %c0_i32_0 : i32, i32
  }
  func.func @transform_6(%arg0: i32) -> (i32, i32) {
    %c0_i32 = arith.constant 0 : i32
    %c0_i32_0 = arith.constant 0 : i32
    %c0_i32_1 = arith.constant 0 : i32
    return %c0_i32, %c0_i32_0 : i32, i32
  }
  func.func @transform_7(%arg0: i32) -> (i32, i32) {
    %c0_i32 = arith.constant 0 : i32
    %c0_i32_0 = arith.constant 0 : i32
    %c0_i32_1 = arith.constant 0 : i32
    return %c0_i32, %c0_i32_0 : i32, i32
  }
  func.func @transform_8(%arg0: i32) -> (i32, i32) {
    %c0_i32 = arith.constant 0 : i32
    %c0_i32_0 = arith.constant 0 : i32
    return %arg0, %c0_i32 : i32, i32
  }
}

</mosaic_0001>

<llo_original>
// kernel: conv1dnet_forward.1
$region0: #{conv1dnet_forward.1}
  #allocation0 [shape = 'u32[]', space=smem, size = 0x4, offset = 0x4, fixed_abs, tag = 'smem constant byte address 0x4 - core index']
  #allocation1 [shape = 'u32[144,128]{1,0:T(1,128)}', space=vmem, size = 0x12000, scoped, tag = 'internal scratch']
  %s0 = inlined_call_operand.vmem [shape: bf16[8,16], index: 0, kind: input, shape index: {}]
  %s1 = inlined_call_operand.vmem [shape: bf16[16,128], index: 1, kind: input, shape index: {}]
  %s2 = inlined_call_operand.hbm [shape: bf16[128,128], index: 2, kind: input, shape index: {}]
  %s3 = inlined_call_operand.hbm [shape: bf16[128,256], index: 3, kind: input, shape index: {}]
  %s4 = inlined_call_operand.hbm [shape: bf16[256,128], index: 4, kind: input, shape index: {}]
  %s5 = inlined_call_operand.hbm [shape: bf16[128,128], index: 5, kind: input, shape index: {}]
  %s6 = inlined_call_operand.vmem [shape: f32[4,128], index: 6, kind: input, shape index: {}]
  %s7 = inlined_call_operand.vmem [shape: f32[1,256], index: 7, kind: input, shape index: {}]
  %s8 = inlined_call_operand.hbm [shape: f32[8,8], index: 8, kind: output, shape index: {}]
  %s9 = sld [smem:[#allocation0]]
  $region58: #{conv1dnet_forward.1} parent=0
    _
  %s11 = ssub.s32 1, %s9
  %s12 = scalar_select 0, %s11, %s9
  $region1: #{conv1dnet_forward.1} parent=0
    #allocation2 [shape = 'u8[32768]{0}', space=vmem, size = 0x8000, scoped, tag = 'input window, operand 2, single buffered']
    #allocation3 [shape = 's32[1]{0}', space=sflag, size = 0x4, scoped, tag = 'scoped memory for conv1dnet_forward.1']
    #allocation4 [shape = 's32[1]{0}', space=sflag, size = 0x4, scoped, tag = 'scoped memory for conv1dnet_forward.1']
    #allocation5 [shape = 'u8[65536]{0}', space=vmem, size = 0x10000, scoped, tag = 'input window, operand 3, single buffered']
    #allocation6 [shape = 's32[1]{0}', space=sflag, size = 0x4, scoped, tag = 'scoped memory for conv1dnet_forward.1']
    #allocation7 [shape = 'u8[65536]{0}', space=vmem, size = 0x10000, scoped, tag = 'input window, operand 4, single buffered']
    #allocation8 [shape = 'u8[32768]{0}', space=vmem, size = 0x8000, scoped, tag = 'input window, operand 5, single buffered']
    #allocation9 [shape = 's32[1]{0}', space=sflag, size = 0x4, scoped, tag = 'scoped memory for conv1dnet_forward.1']
    #allocation10 [shape = 'u8[4096]{0}', space=vmem, size = 0x1000, scoped, tag = 'output window, operand 0, single buffered']
    %13 = vsyncpa [#allocation3], 0
    %14 = vsyncpa [#allocation6], 0
    %15 = vsyncpa [#allocation9], 0
    %16 = vsyncpa [#allocation4], 0
    // Predicated region
    $region2: #{conv1dnet_forward.1} parent=1 // pred_check
      _
    $region3: #{conv1dnet_forward.1} parent=1 // pred_check_branch
      %18 = sbr.rel (0) target = $region5
    $region4: #{conv1dnet_forward.1} parent=1 // pred_region
      _
    $region5: #{conv1dnet_forward.1} parent=1 // pred_fallthru
      _
    // Predicated region
    $region6: #{conv1dnet_forward.1} parent=1 // pred_check
      _
    $region7: #{conv1dnet_forward.1} parent=1 // pred_check_branch
      %20 = sbr.rel (0) target = $region9
    $region8: #{conv1dnet_forward.1} parent=1 // pred_region
      _
    $region9: #{conv1dnet_forward.1} parent=1 // pred_fallthru
      _
    // Predicated region
    $region10: #{conv1dnet_forward.1} parent=1 // pred_check
      _
    $region11: #{conv1dnet_forward.1} parent=1 // pred_check_branch
      %22 = sbr.rel (0) target = $region13
    $region12: #{conv1dnet_forward.1} parent=1 // pred_region
      %s24 = ssub.s32 1024, 1024
      %25 = vsyncadd [#allocation3], %s24
      %s26 = sshll.u32 [#allocation2], 4
      %s27 = int_to_ptr.vmem [resolvable:$true] %s26
      %32 = dma.hbm_to_vmem [thread:$0]  %s2, 1024, %s27, [#allocation3], 64, 64, 4
    $region13: #{conv1dnet_forward.1} parent=1 // pred_fallthru
      _
    // Predicated region
    $region14: #{conv1dnet_forward.1} parent=1 // pred_check
      _
    $region15: #{conv1dnet_forward.1} parent=1 // pred_check_branch
      %34 = sbr.rel (0) target = $region17
    $region16: #{conv1dnet_forward.1} parent=1 // pred_region
      %s36 = ssub.s32 2048, 2048
      %37 = vsyncadd [#allocation6], %s36
      %s38 = sshll.u32 [#allocation5], 4
      %s39 = int_to_ptr.vmem [resolvable:$true] %s38
      %44 = dma.hbm_to_vmem [thread:$0]  %s3, 2048, %s39, [#allocation6], 128, 128, 8
    $region17: #{conv1dnet_forward.1} parent=1 // pred_fallthru
      _
    // Predicated region
    $region18: #{conv1dnet_forward.1} parent=1 // pred_check
      _
    $region19: #{conv1dnet_forward.1} parent=1 // pred_check_branch
      %46 = sbr.rel (0) target = $region21
    $region20: #{conv1dnet_forward.1} parent=1 // pred_region
      %s48 = ssub.s32 2048, 2048
      %49 = vsyncadd [#allocation6], %s48
      %s50 = sshll.u32 [#allocation7], 4
      %s51 = int_to_ptr.vmem [resolvable:$true] %s50
      %56 = dma.hbm_to_vmem [thread:$0]  %s4, 2048, %s51, [#allocation6], 64, 64, 4
    $region21: #{conv1dnet_forward.1} parent=1 // pred_fallthru
      _
    // Predicated region
    $region22: #{conv1dnet_forward.1} parent=1 // pred_check
      _
    $region23: #{conv1dnet_forward.1} parent=1 // pred_check_branch
      %58 = sbr.rel (0) target = $region25
    $region24: #{conv1dnet_forward.1} parent=1 // pred_region
      %s60 = ssub.s32 1024, 1024
      %61 = vsyncadd [#allocation9], %s60
      %s62 = sshll.u32 [#allocation8], 4
      %s63 = int_to_ptr.vmem [resolvable:$true] %s62
      %68 = dma.hbm_to_vmem [thread:$0]  %s5, 1024, %s63, [#allocation9], 64, 64, 4
    $region25: #{conv1dnet_forward.1} parent=1 // pred_fallthru
      _
    // Predicated region
    $region26: #{conv1dnet_forward.1} parent=1 // pred_check
      _
    $region27: #{conv1dnet_forward.1} parent=1 // pred_check_branch
      %70 = sbr.rel (0) target = $region29
    $region28: #{conv1dnet_forward.1} parent=1 // pred_region
      _
    $region29: #{conv1dnet_forward.1} parent=1 // pred_fallthru
      _
    // Predicated region
    $region30: #{conv1dnet_forward.1} parent=1 // pred_check
      _
    $region31: #{conv1dnet_forward.1} parent=1 // pred_check_branch
      %72 = sbr.rel (0) target = $region33
    $region32: #{conv1dnet_forward.1} parent=1 // pred_region
      _
    $region33: #{conv1dnet_forward.1} parent=1 // pred_fallthru
      _
    // Predicated region
    $region34: #{conv1dnet_forward.1} parent=1 // pred_check
      _
    $region35: #{conv1dnet_forward.1} parent=1 // pred_check_branch
      %74 = sbr.rel (0) target = $region37
    $region36: #{conv1dnet_forward.1} parent=1 // pred_region
      %75 = dma.done [#allocation3], 1024
    $region37: #{conv1dnet_forward.1} parent=1 // pred_fallthru
      _
    // Predicated region
    $region38: #{conv1dnet_forward.1} parent=1 // pred_check
      _
    $region39: #{conv1dnet_forward.1} parent=1 // pred_check_branch
      %77 = sbr.rel (0) target = $region41
    $region40: #{conv1dnet_forward.1} parent=1 // pred_region
      %78 = dma.done [#allocation6], 2048
    $region41: #{conv1dnet_forward.1} parent=1 // pred_fallthru
      _
    // Predicated region
    $region42: #{conv1dnet_forward.1} parent=1 // pred_check
      _
    $region43: #{conv1dnet_forward.1} parent=1 // pred_check_branch
      %80 = sbr.rel (0) target = $region45
    $region44: #{conv1dnet_forward.1} parent=1 // pred_region
      %81 = dma.done [#allocation6], 2048
    $region45: #{conv1dnet_forward.1} parent=1 // pred_fallthru
      _
    // Predicated region
    $region46: #{conv1dnet_forward.1} parent=1 // pred_check
      _
    $region47: #{conv1dnet_forward.1} parent=1 // pred_check_branch
      %83 = sbr.rel (0) target = $region49
    $region48: #{conv1dnet_forward.1} parent=1 // pred_region
      %84 = dma.done [#allocation9], 1024
    $region49: #{conv1dnet_forward.1} parent=1 // pred_fallthru
      _
    %v86 = vld [vmem:[%s6] sm:$0xf]
    %v87 = vld [vmem:[%s7] sm:$0x3]
    %v88 = vld [vmem:[%s0] sm:$0xf]
    %v89 = vld [vmem:[%s1] sm:$0xf]
    %v90 = vld [vmem:[%s1 + $0x4] sm:$0xf]
    %v91 = vlaneseq
    %v92 = vshrl.u32 %v91, 7
    %v93 = vsub.s32 0, %v92
    %v94 = vrot.slane %v86, %v93
    %v97 = vunpack.c.l.b16 %v89
    %v98 = vunpack.c.l.b16 %v90
    %v99 = vpack.c.b16 %v98, %v97
    %vm101 = vcmask 130048
    %v103 = vsel %vm101, %v88, 0
    %105 = vmatprep.subr.bf16.mxu0 0
    %106 = vmatpush1.bf16.msra.mxu0 0
    %107 = vmatprep.subr.bf16.mxu0 0
    %108 = vmatpush1.bf16.msra.mxu0 0
    %109 = vmatprep.subr.bf16.mxu0 0
    %110 = vmatpush1.bf16.msra.mxu0 0
    %111 = vmatprep.subr.bf16.mxu0 0
    %112 = vmatpush1.bf16.msra.mxu0 0
    %113 = vmatprep.subr.bf16.mxu0 0
    %114 = vmatpush1.bf16.msra.mxu0 0
    %115 = vmatprep.subr.bf16.mxu0 0
    %116 = vmatpush1.bf16.msra.mxu0 0
    %117 = vmatprep.subr.bf16.mxu0 0
    %118 = vmatpush1.bf16.msra.mxu0 0
    %119 = vmatprep.subr.bf16.mxu0 0
    %120 = vmatpush1.bf16.msra.mxu0 %v99
    %121 = vmatprep.subr.bf16.mxu0 0
    %122 = vmatpush2.bf16.msra.mxu0 0
    %123 = vmatprep.subr.bf16.mxu0 0
    %124 = vmatpush2.bf16.msra.mxu0 0
    %125 = vmatprep.subr.bf16.mxu0 0
    %126 = vmatpush2.bf16.msra.mxu0 0
    %127 = vmatprep.subr.bf16.mxu0 0
    %128 = vmatpush2.bf16.msra.mxu0 0
    %129 = vmatprep.subr.bf16.mxu0 0
    %130 = vmatpush2.bf16.msra.mxu0 0
    %131 = vmatprep.subr.bf16.mxu0 0
    %132 = vmatpush2.bf16.msra.mxu0 0
    %133 = vmatprep.subr.bf16.mxu0 0
    %134 = vmatpush2.bf16.msra.mxu0 0
    %135 = vmatprep.subr.bf16.mxu0 0
    %136 = vmatpush2.bf16.msra.mxu0 0
    %137 = vmatprep.mubr.bf16.mxu0 0
    %138 = vmatmul.mubr.bf16.gmra.mxu0 %v103
    %v139 = vpop.f32.mrf.mxu0
    %v140 = vadd.f32 %v94, %v139
    %v141 = vpop.f32.mrf.mxu0
    %v142 = vpop.f32.mrf.mxu0
    %v143 = vpop.f32.mrf.mxu0
    %144 = vdwg.mxu0
    %v145 = vmax.f32 %v140, 0.0
    %v146 = vpack.c.bf16 %v145, %v145
    %v147 = vld [vmem:[#allocation2] sm:$0xf]
    %v148 = vld [vmem:[#allocation2 + $0x4] sm:$0xf]
    %v149 = vld [vmem:[#allocation2 + $0x8] sm:$0xf]
    %v150 = vld [vmem:[#allocation2 + $0xc] sm:$0xf]
    %v151 = vld [vmem:[#allocation2 + $0x10] sm:$0xf]
    %v152 = vld [vmem:[#allocation2 + $0x14] sm:$0xf]
    %v153 = vld [vmem:[#allocation2 + $0x18] sm:$0xf]
    %v154 = vld [vmem:[#allocation2 + $0x1c] sm:$0xf]
    %v155 = vld [vmem:[#allocation2 + $0x20] sm:$0xf]
    %v156 = vld [vmem:[#allocation2 + $0x24] sm:$0xf]
    %v157 = vld [vmem:[#allocation2 + $0x28] sm:$0xf]
    %v158 = vld [vmem:[#allocation2 + $0x2c] sm:$0xf]
    %v159 = vld [vmem:[#allocation2 + $0x30] sm:$0xf]
    %v160 = vld [vmem:[#allocation2 + $0x34] sm:$0xf]
    %v161 = vld [vmem:[#allocation2 + $0x38] sm:$0xf]
    %v162 = vld [vmem:[#allocation2 + $0x3c] sm:$0xf]
    %v163 = vlaneseq
    %v164 = vshrl.u32 %v163, 7
    %v165 = vsub.s32 1, %v164
    %v166 = vrot.slane %v86, %v165
    %v183 = vunpack.c.l.b16 %v147
    %v184 = vunpack.c.l.b16 %v148
    %v185 = vunpack.c.l.b16 %v149
    %v186 = vunpack.c.l.b16 %v150
    %v187 = vunpack.c.l.b16 %v151
    %v188 = vunpack.c.l.b16 %v152
    %v189 = vunpack.c.l.b16 %v153
    %v190 = vunpack.c.l.b16 %v154
    %v191 = vunpack.c.l.b16 %v155
    %v192 = vunpack.c.l.b16 %v156
    %v193 = vunpack.c.l.b16 %v157
    %v194 = vunpack.c.l.b16 %v158
    %v195 = vunpack.c.l.b16 %v159
    %v196 = vunpack.c.l.b16 %v160
    %v197 = vunpack.c.l.b16 %v161
    %v198 = vunpack.c.l.b16 %v162
    %v199 = vpack.c.b16 %v184, %v183
    %v200 = vpack.c.b16 %v186, %v185
    %v201 = vpack.c.b16 %v188, %v187
    %v202 = vpack.c.b16 %v190, %v189
    %v203 = vpack.c.b16 %v192, %v191
    %v204 = vpack.c.b16 %v194, %v193
    %v205 = vpack.c.b16 %v196, %v195
    %v206 = vpack.c.b16 %v198, %v197
    %215 = vmatprep.subr.bf16.mxu0 0
    %216 = vmatpush1.bf16.msra.mxu0 %v206
    %217 = vmatprep.subr.bf16.mxu0 0
    %218 = vmatpush1.bf16.msra.mxu0 %v205
    %219 = vmatprep.subr.bf16.mxu0 0
    %220 = vmatpush1.bf16.msra.mxu0 %v204
    %221 = vmatprep.subr.bf16.mxu0 0
    %222 = vmatpush1.bf16.msra.mxu0 %v203
    %223 = vmatprep.subr.bf16.mxu0 0
    %224 = vmatpush1.bf16.msra.mxu0 %v202
    %225 = vmatprep.subr.bf16.mxu0 0
    %226 = vmatpush1.bf16.msra.mxu0 %v201
    %227 = vmatprep.subr.bf16.mxu0 0
    %228 = vmatpush1.bf16.msra.mxu0 %v200
    %229 = vmatprep.subr.bf16.mxu0 0
    %230 = vmatpush1.bf16.msra.mxu0 %v199
    %231 = vmatprep.subr.bf16.mxu0 0
    %232 = vmatpush2.bf16.msra.mxu0 0
    %233 = vmatprep.subr.bf16.mxu0 0
    %234 = vmatpush2.bf16.msra.mxu0 0
    %235 = vmatprep.subr.bf16.mxu0 0
    %236 = vmatpush2.bf16.msra.mxu0 0
    %237 = vmatprep.subr.bf16.mxu0 0
    %238 = vmatpush2.bf16.msra.mxu0 0
    %239 = vmatprep.subr.bf16.mxu0 0
    %240 = vmatpush2.bf16.msra.mxu0 0
    %241 = vmatprep.subr.bf16.mxu0 0
    %242 = vmatpush2.bf16.msra.mxu0 0
    %243 = vmatprep.subr.bf16.mxu0 0
    %244 = vmatpush2.bf16.msra.mxu0 0
    %245 = vmatprep.subr.bf16.mxu0 0
    %246 = vmatpush2.bf16.msra.mxu0 0
    %247 = vmatprep.mubr.bf16.mxu0 0
    %248 = vmatmul.mubr.bf16.gmra.mxu0 %v146
    %v249 = vpop.f32.mrf.mxu0
    %v250 = vadd.f32 %v166, %v249
    %v251 = vpop.f32.mrf.mxu0
    %v252 = vpop.f32.mrf.mxu0
    %v253 = vpop.f32.mrf.mxu0
    %254 = vdwg.mxu0
    %v255 = vmax.f32 %v250, 0.0
    %v256 = vpack.c.bf16 %v255, %v255
    %v257 = vld [vmem:[#allocation5] sm:$0xff]
    %v258 = vld [vmem:[#allocation5 + $0x8] sm:$0xff]
    %v259 = vld [vmem:[#allocation5 + $0x10] sm:$0xff]
    %v260 = vld [vmem:[#allocation5 + $0x18] sm:$0xff]
    %v261 = vld [vmem:[#allocation5 + $0x20] sm:$0xff]
    %v262 = vld [vmem:[#allocation5 + $0x28] sm:$0xff]
    %v263 = vld [vmem:[#allocation5 + $0x30] sm:$0xff]
    %v264 = vld [vmem:[#allocation5 + $0x38] sm:$0xff]
    %v265 = vld [vmem:[#allocation5 + $0x40] sm:$0xff]
    %v266 = vld [vmem:[#allocation5 + $0x48] sm:$0xff]
    %v267 = vld [vmem:[#allocation5 + $0x50] sm:$0xff]
    %v268 = vld [vmem:[#allocation5 + $0x58] sm:$0xff]
    %v269 = vld [vmem:[#allocation5 + $0x60] sm:$0xff]
    %v270 = vld [vmem:[#allocation5 + $0x68] sm:$0xff]
    %v271 = vld [vmem:[#allocation5 + $0x70] sm:$0xff]
    %v272 = vld [vmem:[#allocation5 + $0x78] sm:$0xff]
    %v274 = vlaneseq
    %v275 = vshrl.u32 %v274, 7
    %v276 = vsub.s32 0, %v275
    %v277 = vrot.slane %v87, %v276
    %v278 = vlaneseq
    %v279 = vshrl.u32 %v278, 7
    %v280 = vsub.s32 1, %v279
    %v281 = vrot.slane %v87, %v280
    %v300 = vunpack.c.l.b16 %v257
    %v301 = vunpack.c.h.b16 %v257
    %v302 = vunpack.c.l.b16 %v258
    %v303 = vunpack.c.h.b16 %v258
    %v304 = vunpack.c.l.b16 %v259
    %v305 = vunpack.c.h.b16 %v259
    %v306 = vunpack.c.l.b16 %v260
    %v307 = vunpack.c.h.b16 %v260
    %v308 = vunpack.c.l.b16 %v261
    %v309 = vunpack.c.h.b16 %v261
    %v310 = vunpack.c.l.b16 %v262
    %v311 = vunpack.c.h.b16 %v262
    %v312 = vunpack.c.l.b16 %v263
    %v313 = vunpack.c.h.b16 %v263
    %v314 = vunpack.c.l.b16 %v264
    %v315 = vunpack.c.h.b16 %v264
    %v316 = vunpack.c.l.b16 %v265
    %v317 = vunpack.c.h.b16 %v265
    %v318 = vunpack.c.l.b16 %v266
    %v319 = vunpack.c.h.b16 %v266
    %v320 = vunpack.c.l.b16 %v267
    %v321 = vunpack.c.h.b16 %v267
    %v322 = vunpack.c.l.b16 %v268
    %v323 = vunpack.c.h.b16 %v268
    %v324 = vunpack.c.l.b16 %v269
    %v325 = vunpack.c.h.b16 %v269
    %v326 = vunpack.c.l.b16 %v270
    %v327 = vunpack.c.h.b16 %v270
    %v328 = vunpack.c.l.b16 %v271
    %v329 = vunpack.c.h.b16 %v271
    %v330 = vunpack.c.l.b16 %v272
    %v331 = vunpack.c.h.b16 %v272
    %v332 = vpack.c.b16 %v302, %v300
    %v333 = vpack.c.b16 %v303, %v301
    %v334 = vpack.c.b16 %v306, %v304
    %v335 = vpack.c.b16 %v307, %v305
    %v336 = vpack.c.b16 %v310, %v308
    %v337 = vpack.c.b16 %v311, %v309
    %v338 = vpack.c.b16 %v314, %v312
    %v339 = vpack.c.b16 %v315, %v313
    %v340 = vpack.c.b16 %v318, %v316
    %v341 = vpack.c.b16 %v319, %v317
    %v342 = vpack.c.b16 %v322, %v320
    %v343 = vpack.c.b16 %v323, %v321
    %v344 = vpack.c.b16 %v326, %v324
    %v345 = vpack.c.b16 %v327, %v325
    %v346 = vpack.c.b16 %v330, %v328
    %v347 = vpack.c.b16 %v331, %v329
    %364 = vmatprep.subr.bf16.mxu0 %v347
    %365 = vmatpush1.bf16.msra.mxu0 %v346
    %366 = vmatprep.subr.bf16.mxu0 %v345
    %367 = vmatpush1.bf16.msra.mxu0 %v344
    %368 = vmatprep.subr.bf16.mxu0 %v343
    %369 = vmatpush1.bf16.msra.mxu0 %v342
    %370 = vmatprep.subr.bf16.mxu0 %v341
    %371 = vmatpush1.bf16.msra.mxu0 %v340
    %372 = vmatprep.subr.bf16.mxu0 %v339
    %373 = vmatpush1.bf16.msra.mxu0 %v338
    %374 = vmatprep.subr.bf16.mxu0 %v337
    %375 = vmatpush1.bf16.msra.mxu0 %v336
    %376 = vmatprep.subr.bf16.mxu0 %v335
    %377 = vmatpush1.bf16.msra.mxu0 %v334
    %378 = vmatprep.subr.bf16.mxu0 %v333
    %379 = vmatpush1.bf16.msra.mxu0 %v332
    %380 = vmatprep.subr.bf16.mxu0 0
    %381 = vmatpush2.bf16.msra.mxu0 0
    %382 = vmatprep.subr.bf16.mxu0 0
    %383 = vmatpush2.bf16.msra.mxu0 0
    %384 = vmatprep.subr.bf16.mxu0 0
    %385 = vmatpush2.bf16.msra.mxu0 0
    %386 = vmatprep.subr.bf16.mxu0 0
    %387 = vmatpush2.bf16.msra.mxu0 0
    %388 = vmatprep.subr.bf16.mxu0 0
    %389 = vmatpush2.bf16.msra.mxu0 0
    %390 = vmatprep.subr.bf16.mxu0 0
    %391 = vmatpush2.bf16.msra.mxu0 0
    %392 = vmatprep.subr.bf16.mxu0 0
    %393 = vmatpush2.bf16.msra.mxu0 0
    %394 = vmatprep.subr.bf16.mxu0 0
    %395 = vmatpush2.bf16.msra.mxu0 0
    %396 = vmatprep.mubr.bf16.mxu0 0
    %397 = vmatmul.mubr.bf16.gmra.mxu0 %v256
    %v398 = vpop.f32.mrf.mxu0
    %v399 = vadd.f32 %v277, %v398
    %v400 = vpop.f32.mrf.mxu0
    %v401 = vadd.f32 %v281, %v400
    %v402 = vpop.f32.mrf.mxu0
    %v403 = vpop.f32.mrf.mxu0
    %404 = vdwg.mxu0
    %v405 = vmax.f32 %v399, 0.0
    %v406 = vmax.f32 %v401, 0.0
    %v407 = vpack.c.bf16 %v405, %v405
    %v408 = vpack.c.bf16 %v406, %v406
    %v409 = vld [vmem:[#allocation7] sm:$0xf]
    %v410 = vld [vmem:[#allocation7 + $0x4] sm:$0xf]
    %v411 = vld [vmem:[#allocation7 + $0x8] sm:$0xf]
    %v412 = vld [vmem:[#allocation7 + $0xc] sm:$0xf]
    %v413 = vld [vmem:[#allocation7 + $0x10] sm:$0xf]
    %v414 = vld [vmem:[#allocation7 + $0x14] sm:$0xf]
    %v415 = vld [vmem:[#allocation7 + $0x18] sm:$0xf]
    %v416 = vld [vmem:[#allocation7 + $0x1c] sm:$0xf]
    %v417 = vld [vmem:[#allocation7 + $0x20] sm:$0xf]
    %v418 = vld [vmem:[#allocation7 + $0x24] sm:$0xf]
    %v419 = vld [vmem:[#allocation7 + $0x28] sm:$0xf]
    %v420 = vld [vmem:[#allocation7 + $0x2c] sm:$0xf]
    %v421 = vld [vmem:[#allocation7 + $0x30] sm:$0xf]
    %v422 = vld [vmem:[#allocation7 + $0x34] sm:$0xf]
    %v423 = vld [vmem:[#allocation7 + $0x38] sm:$0xf]
    %v424 = vld [vmem:[#allocation7 + $0x3c] sm:$0xf]
    %v425 = vld [vmem:[#allocation7 + $0x40] sm:$0xf]
    %v426 = vld [vmem:[#allocation7 + $0x44] sm:$0xf]
    %v427 = vld [vmem:[#allocation7 + $0x48] sm:$0xf]
    %v428 = vld [vmem:[#allocation7 + $0x4c] sm:$0xf]
    %v429 = vld [vmem:[#allocation7 + $0x50] sm:$0xf]
    %v430 = vld [vmem:[#allocation7 + $0x54] sm:$0xf]
    %v431 = vld [vmem:[#allocation7 + $0x58] sm:$0xf]
    %v432 = vld [vmem:[#allocation7 + $0x5c] sm:$0xf]
    %v433 = vld [vmem:[#allocation7 + $0x60] sm:$0xf]
    %v434 = vld [vmem:[#allocation7 + $0x64] sm:$0xf]
    %v435 = vld [vmem:[#allocation7 + $0x68] sm:$0xf]
    %v436 = vld [vmem:[#allocation7 + $0x6c] sm:$0xf]
    %v437 = vld [vmem:[#allocation7 + $0x70] sm:$0xf]
    %v438 = vld [vmem:[#allocation7 + $0x74] sm:$0xf]
    %v439 = vld [vmem:[#allocation7 + $0x78] sm:$0xf]
    %v440 = vld [vmem:[#allocation7 + $0x7c] sm:$0xf]
    %v441 = vlaneseq
    %v442 = vshrl.u32 %v441, 7
    %v443 = vsub.s32 2, %v442
    %v444 = vrot.slane %v86, %v443
    %v477 = vunpack.c.l.b16 %v409
    %v478 = vunpack.c.l.b16 %v410
    %v479 = vunpack.c.l.b16 %v411
    %v480 = vunpack.c.l.b16 %v412
    %v481 = vunpack.c.l.b16 %v413
    %v482 = vunpack.c.l.b16 %v414
    %v483 = vunpack.c.l.b16 %v415
    %v484 = vunpack.c.l.b16 %v416
    %v485 = vunpack.c.l.b16 %v417
    %v486 = vunpack.c.l.b16 %v418
    %v487 = vunpack.c.l.b16 %v419
    %v488 = vunpack.c.l.b16 %v420
    %v489 = vunpack.c.l.b16 %v421
    %v490 = vunpack.c.l.b16 %v422
    %v491 = vunpack.c.l.b16 %v423
    %v492 = vunpack.c.l.b16 %v424
    %v493 = vunpack.c.l.b16 %v425
    %v494 = vunpack.c.l.b16 %v426
    %v495 = vunpack.c.l.b16 %v427
    %v496 = vunpack.c.l.b16 %v428
    %v497 = vunpack.c.l.b16 %v429
    %v498 = vunpack.c.l.b16 %v430
    %v499 = vunpack.c.l.b16 %v431
    %v500 = vunpack.c.l.b16 %v432
    %v501 = vunpack.c.l.b16 %v433
    %v502 = vunpack.c.l.b16 %v434
    %v503 = vunpack.c.l.b16 %v435
    %v504 = vunpack.c.l.b16 %v436
    %v505 = vunpack.c.l.b16 %v437
    %v506 = vunpack.c.l.b16 %v438
    %v507 = vunpack.c.l.b16 %v439
    %v508 = vunpack.c.l.b16 %v440
    %v509 = vpack.c.b16 %v478, %v477
    %v510 = vpack.c.b16 %v480, %v479
    %v511 = vpack.c.b16 %v482, %v481
    %v512 = vpack.c.b16 %v484, %v483
    %v513 = vpack.c.b16 %v486, %v485
    %v514 = vpack.c.b16 %v488, %v487
    %v515 = vpack.c.b16 %v490, %v489
    %v516 = vpack.c.b16 %v492, %v491
    %v517 = vpack.c.b16 %v494, %v493
    %v518 = vpack.c.b16 %v496, %v495
    %v519 = vpack.c.b16 %v498, %v497
    %v520 = vpack.c.b16 %v500, %v499
    %v521 = vpack.c.b16 %v502, %v501
    %v522 = vpack.c.b16 %v504, %v503
    %v523 = vpack.c.b16 %v506, %v505
    %v524 = vpack.c.b16 %v508, %v507
    %541 = vmatprep.subr.bf16.mxu0 0
    %542 = vmatpush1.bf16.msra.mxu0 %v516
    %543 = vmatprep.subr.bf16.mxu0 0
    %544 = vmatpush1.bf16.msra.mxu0 %v515
    %545 = vmatprep.subr.bf16.mxu0 0
    %546 = vmatpush1.bf16.msra.mxu0 %v514
    %547 = vmatprep.subr.bf16.mxu0 0
    %548 = vmatpush1.bf16.msra.mxu0 %v513
    %549 = vmatprep.subr.bf16.mxu0 0
    %550 = vmatpush1.bf16.msra.mxu0 %v512
    %551 = vmatprep.subr.bf16.mxu0 0
    %552 = vmatpush1.bf16.msra.mxu0 %v511
    %553 = vmatprep.subr.bf16.mxu0 0
    %554 = vmatpush1.bf16.msra.mxu0 %v510
    %555 = vmatprep.subr.bf16.mxu0 0
    %556 = vmatpush1.bf16.msra.mxu0 %v509
    %557 = vmatprep.subr.bf16.mxu0 0
    %558 = vmatpush2.bf16.msra.mxu0 %v524
    %559 = vmatprep.subr.bf16.mxu0 0
    %560 = vmatpush2.bf16.msra.mxu0 %v523
    %561 = vmatprep.subr.bf16.mxu0 0
    %562 = vmatpush2.bf16.msra.mxu0 %v522
    %563 = vmatprep.subr.bf16.mxu0 0
    %564 = vmatpush2.bf16.msra.mxu0 %v521
    %565 = vmatprep.subr.bf16.mxu0 0
    %566 = vmatpush2.bf16.msra.mxu0 %v520
    %567 = vmatprep.subr.bf16.mxu0 0
    %568 = vmatpush2.bf16.msra.mxu0 %v519
    %569 = vmatprep.subr.bf16.mxu0 0
    %570 = vmatpush2.bf16.msra.mxu0 %v518
    %571 = vmatprep.subr.bf16.mxu0 0
    %572 = vmatpush2.bf16.msra.mxu0 %v517
    %573 = vmatprep.mubr.bf16.mxu0 %v408
    %574 = vmatmul.mubr.bf16.gmra.mxu0 %v407
    %v575 = vpop.f32.mrf.mxu0
    %v576 = vadd.f32 %v444, %v575
    %v577 = vpop.f32.mrf.mxu0
    %v578 = vpop.f32.mrf.mxu0
    %v579 = vpop.f32.mrf.mxu0
    %580 = vdwg.mxu0
    %v581 = vmax.f32 %v576, 0.0
    %v582 = vpack.c.bf16 %v581, %v581
    %v583 = vld [vmem:[#allocation8] sm:$0xf]
    %v584 = vld [vmem:[#allocation8 + $0x4] sm:$0xf]
    %v585 = vld [vmem:[#allocation8 + $0x8] sm:$0xf]
    %v586 = vld [vmem:[#allocation8 + $0xc] sm:$0xf]
    %v587 = vld [vmem:[#allocation8 + $0x10] sm:$0xf]
    %v588 = vld [vmem:[#allocation8 + $0x14] sm:$0xf]
    %v589 = vld [vmem:[#allocation8 + $0x18] sm:$0xf]
    %v590 = vld [vmem:[#allocation8 + $0x1c] sm:$0xf]
    %v591 = vld [vmem:[#allocation8 + $0x20] sm:$0xf]
    %v592 = vld [vmem:[#allocation8 + $0x24] sm:$0xf]
    %v593 = vld [vmem:[#allocation8 + $0x28] sm:$0xf]
    %v594 = vld [vmem:[#allocation8 + $0x2c] sm:$0xf]
    %v595 = vld [vmem:[#allocation8 + $0x30] sm:$0xf]
    %v596 = vld [vmem:[#allocation8 + $0x34] sm:$0xf]
    %v597 = vld [vmem:[#allocation8 + $0x38] sm:$0xf]
    %v598 = vld [vmem:[#allocation8 + $0x3c] sm:$0xf]
    %v599 = vlaneseq
    %v600 = vshrl.u32 %v599, 7
    %v601 = vsub.s32 3, %v600
    %v602 = vrot.slane %v86, %v601
    %v619 = vunpack.c.l.b16 %v583
    %v620 = vunpack.c.l.b16 %v584
    %v621 = vunpack.c.l.b16 %v585
    %v622 = vunpack.c.l.b16 %v586
    %v623 = vunpack.c.l.b16 %v587
    %v624 = vunpack.c.l.b16 %v588
    %v625 = vunpack.c.l.b16 %v589
    %v626 = vunpack.c.l.b16 %v590
    %v627 = vunpack.c.l.b16 %v591
    %v628 = vunpack.c.l.b16 %v592
    %v629 = vunpack.c.l.b16 %v593
    %v630 = vunpack.c.l.b16 %v594
    %v631 = vunpack.c.l.b16 %v595
    %v632 = vunpack.c.l.b16 %v596
    %v633 = vunpack.c.l.b16 %v597
    %v634 = vunpack.c.l.b16 %v598
    %v635 = vpack.c.b16 %v620, %v619
    %v636 = vpack.c.b16 %v622, %v621
    %v637 = vpack.c.b16 %v624, %v623
    %v638 = vpack.c.b16 %v626, %v625
    %v639 = vpack.c.b16 %v628, %v627
    %v640 = vpack.c.b16 %v630, %v629
    %v641 = vpack.c.b16 %v632, %v631
    %v642 = vpack.c.b16 %v634, %v633
    %651 = vmatprep.subr.bf16.mxu0 0
    %652 = vmatpush1.bf16.msra.mxu0 %v642
    %653 = vmatprep.subr.bf16.mxu0 0
    %654 = vmatpush1.bf16.msra.mxu0 %v641
    %655 = vmatprep.subr.bf16.mxu0 0
    %656 = vmatpush1.bf16.msra.mxu0 %v640
    %657 = vmatprep.subr.bf16.mxu0 0
    %658 = vmatpush1.bf16.msra.mxu0 %v639
    %659 = vmatprep.subr.bf16.mxu0 0
    %660 = vmatpush1.bf16.msra.mxu0 %v638
    %661 = vmatprep.subr.bf16.mxu0 0
    %662 = vmatpush1.bf16.msra.mxu0 %v637
    %663 = vmatprep.subr.bf16.mxu0 0
    %664 = vmatpush1.bf16.msra.mxu0 %v636
    %665 = vmatprep.subr.bf16.mxu0 0
    %666 = vmatpush1.bf16.msra.mxu0 %v635
    %667 = vmatprep.subr.bf16.mxu0 0
    %668 = vmatpush2.bf16.msra.mxu0 0
    %669 = vmatprep.subr.bf16.mxu0 0
    %670 = vmatpush2.bf16.msra.mxu0 0
    %671 = vmatprep.subr.bf16.mxu0 0
    %672 = vmatpush2.bf16.msra.mxu0 0
    %673 = vmatprep.subr.bf16.mxu0 0
    %674 = vmatpush2.bf16.msra.mxu0 0
    %675 = vmatprep.subr.bf16.mxu0 0
    %676 = vmatpush2.bf16.msra.mxu0 0
    %677 = vmatprep.subr.bf16.mxu0 0
    %678 = vmatpush2.bf16.msra.mxu0 0
    %679 = vmatprep.subr.bf16.mxu0 0
    %680 = vmatpush2.bf16.msra.mxu0 0
    %681 = vmatprep.subr.bf16.mxu0 0
    %682 = vmatpush2.bf16.msra.mxu0 0
    %683 = vmatprep.mubr.bf16.mxu0 0
    %684 = vmatmul.mubr.bf16.gmra.mxu0 %v582
    %v685 = vpop.f32.mrf.mxu0
    %v686 = vadd.f32 %v602, %v685
    %v687 = vpop.f32.mrf.mxu0
    %v688 = vpop.f32.mrf.mxu0
    %v689 = vpop.f32.mrf.mxu0
    %690 = vdwg.mxu0
    %vm691 = vcmask 64512
    %692 = vst.msk [vmem:[#allocation10] sm:$0xff] %vm691, %v686
    // Predicated region
    $region50: #{conv1dnet_forward.1} parent=1 // pred_check
      _
    $region51: #{conv1dnet_forward.1} parent=1 // pred_check_branch
      %694 = sbr.rel (0) target = $region53
    $region52: #{conv1dnet_forward.1} parent=1 // pred_region
      %s696 = ssub.s32 128, 128
      %697 = vsyncadd [#allocation4], %s696
      %s699 = sshll.u32 [#allocation10], 4
      %s700 = int_to_ptr.vmem [resolvable:$true] %s699
      %702 = dma.vmem_to_hbm [thread:$0]  %s700, 128, %s8, [#allocation4]
    $region53: #{conv1dnet_forward.1} parent=1 // pred_fallthru
      _
    // Predicated region
    $region54: #{conv1dnet_forward.1} parent=1 // pred_check
      _
    $region55: #{conv1dnet_forward.1} parent=1 // pred_check_branch
      %704 = sbr.rel (0) target = $region57
    $region56: #{conv1dnet_forward.1} parent=1 // pred_region
      %705 = dma.done [#allocation4], 128
    $region57: #{conv1dnet_forward.1} parent=1 // pred_fallthru
      _
    %706 = vsyncpa [#allocation3], 1
    %707 = vsyncpa [#allocation6], 1
    %708 = vsyncpa [#allocation9], 1
    %709 = vsyncpa [#allocation4], 1

</llo_original>
